<compile_context>
chip_gen: v7x
topology: tpu7x:2x2x1
jax: 0.10.0
libtpu: 0.0.40
codegen_flags: <defaults>
</compile_context>

<pallas_src>
import functools

import jax
import jax.numpy as jnp
from jax.experimental import pallas as pl
from jax.experimental.pallas import tpu as pltpu


_LANE = 128
_VMEM_TILE_BUDGET = 16 * 1024 * 1024   # bytes for double-buffered x-in + x-out tiles
_VMEM_LIMIT = 32 * 1024 * 1024         # scoped VMEM limit, safe on v5e/v6e/v7x
_FAST_PATH_BYTES = 12 * 1024 * 1024    # whole-image fused path allowed below this


def _round_up(n, m):
    return -(-n // m) * m


# --------------------------------------------------------------------------
# fast path: one fused kernel per batch image (whole (C, HW) block resident)
# --------------------------------------------------------------------------
def _scse_fused_kernel(x_ref, w1t_ref, b1_ref, w2_ref, b2_ref, wsp_ref, o_ref,
                       *, inv_hw):
    # x_ref block: (1, C, HWp) -> (C, HWp); padded lanes are zero.
    x = x_ref[0].astype(jnp.float32)

    # ---- channel SE: pool + tiny MLP (runs once per image, cost negligible)
    pooled = jnp.sum(x, axis=1, keepdims=True) * inv_hw                 # (C, 1)
    h = jnp.sum(w1t_ref[...] * pooled, axis=0, keepdims=True) + b1_ref[...]
    h = jnp.maximum(h, 0.0)                                             # (1, Cr)
    z = jnp.sum(w2_ref[...] * h, axis=1, keepdims=True) + b2_ref[...]   # (C, 1)
    chn = jnp.exp(jax.nn.sigmoid(z))

    # ---- spatial SE: 1x1 conv over channels on the MXU (no (C,HW) temp)
    spa = jnp.exp(jax.nn.sigmoid(
        jnp.dot(wsp_ref[...], x, preferred_element_type=jnp.float32)))  # (1, HWp)

    o_ref[0] = (x * chn * spa).astype(o_ref.dtype)


# --------------------------------------------------------------------------
# tiled path, pass 1: pooled sum accumulated across HW tiles, channel gate
# computed once per batch at the last tile (no per-tile MLP recompute).
# --------------------------------------------------------------------------
def _scse_pool_kernel(x_ref, w1t_ref, b1_ref, w2_ref, b2_ref, chn_ref, sum_ref,
                      *, inv_hw):
    t = pl.program_id(1)

    @pl.when(t == 0)
    def _():
        sum_ref[...] = jnp.zeros_like(sum_ref)

    x = x_ref[0].astype(jnp.float32)                                    # (C, T)
    sum_ref[...] += jnp.sum(x, axis=1, keepdims=True)                   # (C, 1)

    @pl.when(t == pl.num_programs(1) - 1)
    def _():
        pooled = sum_ref[...] * inv_hw                                  # (C, 1)
        h = jnp.sum(w1t_ref[...] * pooled, axis=0, keepdims=True) + b1_ref[...]
        h = jnp.maximum(h, 0.0)                                         # (1, Cr)
        z = jnp.sum(w2_ref[...] * h, axis=1, keepdims=True) + b2_ref[...]
        chn_ref[0] = jnp.exp(jax.nn.sigmoid(z))                         # (C, 1)


# --------------------------------------------------------------------------
# tiled path, pass 2: spatial gate (MXU dot over C) + rescale, per HW tile
# --------------------------------------------------------------------------
def _scse_scale_kernel(x_ref, chn_ref, wsp_ref, o_ref):
    x = x_ref[0].astype(jnp.float32)                                    # (C, T)
    spa = jnp.exp(jax.nn.sigmoid(
        jnp.dot(wsp_ref[...], x, preferred_element_type=jnp.float32)))  # (1, T)
    o_ref[0] = (x * chn_ref[0] * spa).astype(o_ref.dtype)


def scse_block(x, w1, b1, w2, b2, wsp, *, force_tiled=False, tile_hw=None):
    """x: (B, C, H, W).  w1:(Cr,C), b1:(Cr,), w2:(C,Cr), b2:(C,), wsp:(C,)."""
    B, C, H, W = x.shape
    Cr = w1.shape[0]
    HW = H * W
    itemsize = jnp.dtype(x.dtype).itemsize
    inv_hw = 1.0 / float(HW)

    # parameters in kernel-friendly 2D layouts (all tiny)
    w1t = jnp.asarray(w1, jnp.float32).T                  # (C, Cr)
    b1r = jnp.asarray(b1, jnp.float32).reshape(1, Cr)
    w2m = jnp.asarray(w2, jnp.float32)                    # (C, Cr)
    b2c = jnp.asarray(b2, jnp.float32).reshape(C, 1)
    wspr = jnp.asarray(wsp, jnp.float32).reshape(1, C)

    hw128 = _round_up(HW, _LANE)                          # lane-dense width
    fast_bytes = 4 * C * hw128 * itemsize                 # double-buffered in + out
    use_fast = (not force_tiled) and fast_bytes <= _FAST_PATH_BYTES

    if use_fast:
        t_hw = hw128
    elif tile_hw is not None:
        assert tile_hw % _LANE == 0, "tile_hw must be a multiple of 128"
        t_hw = tile_hw
    else:
        # biggest lane tile whose double-buffered in+out stays in budget
        t_max = max(_LANE,
                    (_VMEM_TILE_BUDGET // (4 * C * itemsize)) // _LANE * _LANE)
        t_hw = min(t_max, hw128)
    n_t = _round_up(HW, t_hw) // t_hw
    hw_pad = n_t * t_hw

    x3 = x.reshape(B, C, HW)
    if hw_pad != HW:
        # zero padding: contributes nothing to the pool sum or the spatial dot
        x3 = jnp.pad(x3, ((0, 0), (0, 0), (0, hw_pad - HW)))

    def _cparams(sem):
        return pltpu.CompilerParams(dimension_semantics=sem,
                                    vmem_limit_bytes=_VMEM_LIMIT)

    if use_fast:
        full1 = lambda shape: pl.BlockSpec(shape, lambda b: (0, 0))
        out3 = pl.pallas_call(
            functools.partial(_scse_fused_kernel, inv_hw=inv_hw),
            out_shape=jax.ShapeDtypeStruct((B, C, hw_pad), x.dtype),
            grid_spec=pltpu.PrefetchScalarGridSpec(
                num_scalar_prefetch=0,
                grid=(B,),
                in_specs=[
                    pl.BlockSpec((1, C, hw_pad), lambda b: (b, 0, 0)),
                    full1((C, Cr)), full1((1, Cr)), full1((C, Cr)),
                    full1((C, 1)), full1((1, C)),
                ],
                out_specs=pl.BlockSpec((1, C, hw_pad), lambda b: (b, 0, 0)),
            ),
            compiler_params=_cparams(("parallel",)),
            cost_estimate=pl.CostEstimate(
                flops=int(6 * B * C * hw_pad),
                transcendentals=int(2 * B * (hw_pad + C)),
                bytes_accessed=int(2 * B * C * hw_pad * itemsize)),
        )(x3, w1t, b1r, w2m, b2c, wspr)
    else:
        full2 = lambda shape: pl.BlockSpec(shape, lambda b, t: (0, 0))

        # ---- pass 1: channel gate chn (B, C, 1) f32 ----
        chn = pl.pallas_call(
            functools.partial(_scse_pool_kernel, inv_hw=inv_hw),
            out_shape=jax.ShapeDtypeStruct((B, C, 1), jnp.float32),
            grid_spec=pltpu.PrefetchScalarGridSpec(
                num_scalar_prefetch=0,
                grid=(B, n_t),
                in_specs=[
                    pl.BlockSpec((1, C, t_hw), lambda b, t: (b, 0, t)),
                    full2((C, Cr)), full2((1, Cr)), full2((C, Cr)),
                    full2((C, 1)),
                ],
                out_specs=pl.BlockSpec((1, C, 1), lambda b, t: (b, 0, 0)),
                scratch_shapes=[pltpu.VMEM((C, 1), jnp.float32)],
            ),
            compiler_params=_cparams(("parallel", "arbitrary")),
            cost_estimate=pl.CostEstimate(
                flops=int(B * C * hw_pad),
                transcendentals=int(2 * B * C),
                bytes_accessed=int(B * C * hw_pad * itemsize)),
        )(x3, w1t, b1r, w2m, b2c)

        # ---- pass 2: spatial gate + rescale, tiled over HW ----
        out3 = pl.pallas_call(
            _scse_scale_kernel,
            out_shape=jax.ShapeDtypeStruct((B, C, hw_pad), x.dtype),
            grid_spec=pltpu.PrefetchScalarGridSpec(
                num_scalar_prefetch=0,
                grid=(B, n_t),
                in_specs=[
                    pl.BlockSpec((1, C, t_hw), lambda b, t: (b, 0, t)),
                    pl.BlockSpec((1, C, 1), lambda b, t: (b, 0, 0)),
                    full2((1, C)),
                ],
                out_specs=pl.BlockSpec((1, C, t_hw), lambda b, t: (b, 0, t)),
            ),
            compiler_params=_cparams(("parallel", "parallel")),
            cost_estimate=pl.CostEstimate(
                flops=int(4 * B * C * hw_pad),
                transcendentals=int(2 * B * hw_pad),
                bytes_accessed=int(2 * B * C * hw_pad * itemsize)),
        )(x3, chn, wspr)

    if hw_pad != HW:
        out3 = out3[:, :, :HW]
    return out3.reshape(B, C, H, W)


def scse_ref(x, w1, b1, w2, b2, wsp):
    """Pure-JAX reference mirroring the PyTorch forward."""
    pooled = x.mean(axis=(2, 3))                                       # (B, C)
    h = jnp.maximum(pooled @ w1.T + b1, 0.0)                           # (B, Cr)
    chn = jnp.exp(jax.nn.sigmoid(h @ w2.T + b2))                       # (B, C)
    spa = jnp.exp(jax.nn.sigmoid(jnp.einsum('bchw,c->bhw', x, wsp)))   # (B, H, W)
    return x * chn[:, :, None, None] * spa[:, None, :, :]


if __name__ == "__main__":
    B, C, H, W = 2, 32, 16, 16
    reduct_ratio = 16
    Cr = C // reduct_ratio

    key = jax.random.PRNGKey(0)
    kx, k1, kb1, k2, kb2, ks = jax.random.split(key, 6)

    x = jax.random.normal(kx, (B, C, H, W), jnp.float32)

    # deterministic synthetic parameters (shapes match the PyTorch 1x1 convs)
    w1 = jax.random.normal(k1, (Cr, C), jnp.float32) * 0.1     # linear1.weight (Cr,C,1,1)
    b1 = jax.random.normal(kb1, (Cr,), jnp.float32) * 0.1      # linear1.bias
    w2 = jax.random.normal(k2, (C, Cr), jnp.float32) * 0.1     # linear2.weight (C,Cr,1,1)
    b2 = jax.random.normal(kb2, (C,), jnp.float32) * 0.1       # linear2.bias
    wsp = jax.random.normal(ks, (C,), jnp.float32) * 0.1       # spatial conv weight (1,C,1,1)

    ref = scse_ref(x, w1, b1, w2, b2, wsp)

    # fast (single fused kernel) path — picked automatically for small maps
    out_fast = jax.block_until_ready(scse_block(x, w1, b1, w2, b2, wsp))
    assert out_fast.shape == (B, C, H, W)
    assert jnp.allclose(out_fast, ref, atol=1e-5, rtol=1e-5), "fast path mismatch"

    # tiled two-pass path (forced with a small HW tile so the cross-tile
    # pool accumulator and per-tile rescale are exercised on-device too)
    out_tiled = jax.block_until_ready(
        scse_block(x, w1, b1, w2, b2, wsp, force_tiled=True, tile_hw=128))
    assert out_tiled.shape == (B, C, H, W)
    assert jnp.allclose(out_tiled, ref, atol=1e-5, rtol=1e-5), "tiled path mismatch"

    print("KERNEL_OK")
</pallas_src>

<mosaic_0001>
module attributes {stable_mosaic.version = 11 : i64} {
  func.func @_scse_fused_kernel(%arg0: i32, %arg1: memref<1x32x256xf32, #tpu.memory_space<vmem>>, %arg2: memref<32x2xf32, #tpu.memory_space<vmem>>, %arg3: memref<1x2xf32, #tpu.memory_space<vmem>>, %arg4: memref<32x2xf32, #tpu.memory_space<vmem>>, %arg5: memref<32x1xf32, #tpu.memory_space<vmem>>, %arg6: memref<1x32xf32, #tpu.memory_space<vmem>>, %arg7: memref<1x32x256xf32, #tpu.memory_space<vmem>>) attributes {dimension_semantics = [#tpu.dimension_semantics<parallel>], iteration_bounds = array<i64: 2>, scalar_prefetch = 0 : i64, scratch_operands = 0 : i64, tpu.core_type = #tpu.core_type<tc>, window_params = [{transform_indices = @transform_0, window_bounds = array<i64: 1, 32, 256>}, {pipeline_mode = #tpu.pipeline_mode<synchronous>, transform_indices = @transform_1, window_bounds = array<i64: 32, 2>}, {pipeline_mode = #tpu.pipeline_mode<synchronous>, transform_indices = @transform_2, window_bounds = array<i64: 1, 2>}, {pipeline_mode = #tpu.pipeline_mode<synchronous>, transform_indices = @transform_3, window_bounds = array<i64: 32, 2>}, {pipeline_mode = #tpu.pipeline_mode<synchronous>, transform_indices = @transform_4, window_bounds = array<i64: 32, 1>}, {pipeline_mode = #tpu.pipeline_mode<synchronous>, transform_indices = @transform_5, window_bounds = array<i64: 1, 32>}, {transform_indices = @transform_6, window_bounds = array<i64: 1, 32, 256>}]} {
    %c0 = arith.constant 0 : index
    %c0_0 = arith.constant 0 : index
    %c0_1 = arith.constant 0 : index
    %0 = vector.load %arg1[%c0, %c0_0, %c0_1] : memref<1x32x256xf32, #tpu.memory_space<vmem>>, vector<1x32x256xf32>
    %1 = vector.shape_cast %0 : vector<1x32x256xf32> to vector<32x256xf32>
    %cst = arith.constant dense<0.000000e+00> : vector<32xf32>
    %2 = vector.multi_reduction <add>, %1, %cst [1] : vector<32x256xf32> to vector<32xf32>
    %3 = vector.shape_cast %2 : vector<32xf32> to vector<32x1xf32>
    %cst_2 = arith.constant 3.906250e-03 : f32
    %4 = vector.broadcast %cst_2 : f32 to vector<32x1xf32>
    %5 = arith.mulf %3, %4 : vector<32x1xf32>
    %c0_3 = arith.constant 0 : index
    %c0_4 = arith.constant 0 : index
    %6 = vector.load %arg2[%c0_3, %c0_4] : memref<32x2xf32, #tpu.memory_space<vmem>>, vector<32x2xf32>
    %7 = vector.broadcast %5 : vector<32x1xf32> to vector<32x2xf32>
    %8 = arith.mulf %6, %7 : vector<32x2xf32>
    %cst_5 = arith.constant dense<0.000000e+00> : vector<2xf32>
    %9 = vector.multi_reduction <add>, %8, %cst_5 [0] : vector<32x2xf32> to vector<2xf32>
    %10 = vector.shape_cast %9 : vector<2xf32> to vector<1x2xf32>
    %c0_6 = arith.constant 0 : index
    %c0_7 = arith.constant 0 : index
    %11 = vector.load %arg3[%c0_6, %c0_7] : memref<1x2xf32, #tpu.memory_space<vmem>>, vector<1x2xf32>
    %12 = arith.addf %10, %11 : vector<1x2xf32>
    %cst_8 = arith.constant 0.000000e+00 : f32
    %13 = vector.broadcast %cst_8 : f32 to vector<1x2xf32>
    %14 = arith.maximumf %12, %13 : vector<1x2xf32>
    %c0_9 = arith.constant 0 : index
    %c0_10 = arith.constant 0 : index
    %15 = vector.load %arg4[%c0_9, %c0_10] : memref<32x2xf32, #tpu.memory_space<vmem>>, vector<32x2xf32>
    %16 = vector.broadcast %14 : vector<1x2xf32> to vector<32x2xf32>
    %17 = arith.mulf %15, %16 : vector<32x2xf32>
    %cst_11 = arith.constant dense<0.000000e+00> : vector<32xf32>
    %18 = vector.multi_reduction <add>, %17, %cst_11 [1] : vector<32x2xf32> to vector<32xf32>
    %19 = vector.shape_cast %18 : vector<32xf32> to vector<32x1xf32>
    %c0_12 = arith.constant 0 : index
    %c0_13 = arith.constant 0 : index
    %20 = vector.load %arg5[%c0_12, %c0_13] : memref<32x1xf32, #tpu.memory_space<vmem>>, vector<32x1xf32>
    %21 = arith.addf %19, %20 : vector<32x1xf32>
    %22 = arith.negf %21 : vector<32x1xf32>
    %23 = math.exp %22 : vector<32x1xf32>
    %cst_14 = arith.constant 1.000000e+00 : f32
    %24 = vector.broadcast %cst_14 : f32 to vector<32x1xf32>
    %25 = arith.addf %24, %23 : vector<32x1xf32>
    %26 = arith.divf %24, %25 : vector<32x1xf32>
    %27 = math.exp %26 : vector<32x1xf32>
    %c0_15 = arith.constant 0 : index
    %c0_16 = arith.constant 0 : index
    %28 = vector.load %arg6[%c0_15, %c0_16] : memref<1x32xf32, #tpu.memory_space<vmem>>, vector<1x32xf32>
    %cst_17 = arith.constant dense<0.000000e+00> : vector<1x256xf32>
    %29 = tpu.matmul %28, %1, %cst_17 {dimension_numbers = #tpu.dot_dimension_numbers<[1], [0], [0], [1], [0, 0, 1, 1], [], []>} : vector<1x32xf32>, vector<32x256xf32>, vector<1x256xf32> -> vector<1x256xf32>
    %30 = arith.negf %29 : vector<1x256xf32>
    %31 = math.exp %30 : vector<1x256xf32>
    %cst_18 = arith.constant 1.000000e+00 : f32
    %32 = vector.broadcast %cst_18 : f32 to vector<1x256xf32>
    %33 = arith.addf %32, %31 : vector<1x256xf32>
    %34 = arith.divf %32, %33 : vector<1x256xf32>
    %35 = math.exp %34 : vector<1x256xf32>
    %36 = vector.broadcast %27 : vector<32x1xf32> to vector<32x256xf32>
    %37 = arith.mulf %1, %36 : vector<32x256xf32>
    %38 = vector.broadcast %35 : vector<1x256xf32> to vector<32x256xf32>
    %39 = arith.mulf %37, %38 : vector<32x256xf32>
    %c0_19 = arith.constant 0 : index
    %c0_20 = arith.constant 0 : index
    %c0_21 = arith.constant 0 : index
    %40 = vector.load %arg7[%c0_19, %c0_20, %c0_21] : memref<1x32x256xf32, #tpu.memory_space<vmem>>, vector<1x32x256xf32>
    %41 = vector.shape_cast %40 : vector<1x32x256xf32> to vector<32x256xf32>
    %42 = vector.shape_cast %39 : vector<32x256xf32> to vector<1x32x256xf32>
    tpu.vector_store %arg7[%c0_19, %c0_20, %c0_21], %42 {strides = array<i32>} : memref<1x32x256xf32, #tpu.memory_space<vmem>>, vector<1x32x256xf32>,
    return
  }
  func.func @transform_0(%arg0: i32) -> (i32, i32, i32) {
    %c0_i32 = arith.constant 0 : i32
    %c0_i32_0 = arith.constant 0 : i32
    %c0_i32_1 = arith.constant 0 : i32
    return %arg0, %c0_i32, %c0_i32_0 : i32, i32, i32
  }
  func.func @transform_1(%arg0: i32) -> (i32, i32) {
    %c0_i32 = arith.constant 0 : i32
    %c0_i32_0 = arith.constant 0 : i32
    %c0_i32_1 = arith.constant 0 : i32
    return %c0_i32, %c0_i32_0 : i32, i32
  }
  func.func @transform_2(%arg0: i32) -> (i32, i32) {
    %c0_i32 = arith.constant 0 : i32
    %c0_i32_0 = arith.constant 0 : i32
    %c0_i32_1 = arith.constant 0 : i32
    return %c0_i32, %c0_i32_0 : i32, i32
  }
  func.func @transform_3(%arg0: i32) -> (i32, i32) {
    %c0_i32 = arith.constant 0 : i32
    %c0_i32_0 = arith.constant 0 : i32
    %c0_i32_1 = arith.constant 0 : i32
    return %c0_i32, %c0_i32_0 : i32, i32
  }
  func.func @transform_4(%arg0: i32) -> (i32, i32) {
    %c0_i32 = arith.constant 0 : i32
    %c0_i32_0 = arith.constant 0 : i32
    %c0_i32_1 = arith.constant 0 : i32
    return %c0_i32, %c0_i32_0 : i32, i32
  }
  func.func @transform_5(%arg0: i32) -> (i32, i32) {
    %c0_i32 = arith.constant 0 : i32
    %c0_i32_0 = arith.constant 0 : i32
    %c0_i32_1 = arith.constant 0 : i32
    return %c0_i32, %c0_i32_0 : i32, i32
  }
  func.func @transform_6(%arg0: i32) -> (i32, i32, i32) {
    %c0_i32 = arith.constant 0 : i32
    %c0_i32_0 = arith.constant 0 : i32
    %c0_i32_1 = arith.constant 0 : i32
    return %arg0, %c0_i32, %c0_i32_0 : i32, i32, i32
  }
}

</mosaic_0001>

<llo_original>
// kernel: tpu_custom_call.1
$region0: #{tpu_custom_call.1}
  #allocation0 [shape = 'u32[]', space=smem, size = 0x4, offset = 0x4, fixed_abs, tag = 'smem constant byte address 0x4 - core index']
  #allocation1 [shape = 'u32[144,128]{1,0:T(1,128)}', space=vmem, size = 0x12000, scoped, tag = 'internal scratch']
  %s0 = inlined_call_operand.hbm [shape: f32[2,32,256], index: 0, kind: input, shape index: {}]
  %s1 = inlined_call_operand.vmem [shape: f32[32,2], index: 1, kind: input, shape index: {}]
  %s2 = inlined_call_operand.vmem [shape: f32[1,2], index: 2, kind: input, shape index: {}]
  %s3 = inlined_call_operand.vmem [shape: f32[32,2], index: 3, kind: input, shape index: {}]
  %s4 = inlined_call_operand.vmem [shape: f32[32,1], index: 4, kind: input, shape index: {}]
  %s5 = inlined_call_operand.vmem [shape: f32[1,32], index: 5, kind: input, shape index: {}]
  %s6 = inlined_call_operand.hbm [shape: f32[2,32,256], index: 6, kind: output, shape index: {}]
  %s7 = sld [smem:[#allocation0]]
  $region61: #{tpu_custom_call.1} parent=0
    _
  %s9 = ssub.s32 1, %s7
  %s10 = scalar_select 0, %s9, %s7
  $region1: #{tpu_custom_call.1} parent=0
    #allocation2 [shape = 'u8[65536]{0}', space=vmem, size = 0x10000, scoped, tag = 'input window, operand 0']
    #allocation3 [shape = 's32[2]{0}', space=sflag, size = 0x8, scoped, tag = 'scoped memory for tpu_custom_call.1']
    #allocation4 [shape = 's32[2]{0}', space=sflag, size = 0x8, scoped, tag = 'scoped memory for tpu_custom_call.1']
    #allocation5 [shape = 'u8[65536]{0}', space=vmem, size = 0x10000, scoped, tag = 'output window, operand 0']
    %11 = vsyncpa [#allocation3], 0
    %s12 = scalar_lea.sflag [#allocation3], 1
    %13 = vsyncpa %s12, 0
    %14 = vsyncpa [#allocation4], 0
    %s15 = scalar_lea.sflag [#allocation4], 1
    %16 = vsyncpa %s15, 0
    loop: start=0, step=1, limit=4
    $region2: #{tpu_custom_call.1} parent=1 // loop_pre_header
      _
    $region3: #{tpu_custom_call.1} parent=1 // loop_header
      %s18 = sphi 0, %s22
      %p19 = scmp.ge.s32.totalorder %s18, 4
      %s28 = sphi 0, %s30
      %s31 = sphi 0, %s28
      %s32 = sphi 0, %s31
      %s48 = sphi 0, %s32
      %s52 = sphi 0, %s52
      %s54 = sphi 0, %s52
      %s55 = sphi 0, %s54
      %s69 = sphi 0, %s55
      %s73 = sphi 0, %s73
      %s75 = sphi 0, %s73
      %s76 = sphi 0, %s75
      %s90 = sphi 0, %s76
      %s94 = sphi 0, %s94
      %s96 = sphi 0, %s94
      %s97 = sphi 0, %s96
      %s111 = sphi 0, %s97
      %s115 = sphi 0, %s115
      %s117 = sphi 0, %s115
      %s118 = sphi 0, %s117
      %s132 = sphi 0, %s118
      %s136 = sphi 0, %s136
      %s138 = sphi 0, %s136
      %s139 = sphi 0, %s138
      %s153 = sphi 0, %s139
      %s159 = sphi 0, %s161
      %s162 = sphi 0, %s159
      %s163 = sphi 0, %s162
      %s179 = sphi 0, %s163
    $region4: #{tpu_custom_call.1} parent=1 // loop_header_branch
      %21 = sbr.rel (%p19) target = $region8
    $region5: #{tpu_custom_call.1} parent=1 // loop_body
      %s23 = ssub.s32 %s18, 1
      %s24 = ssub.s32 %s18, 2
      %s25 = sadd.s32 %s18, 1
      %s26 = ssub.s32 %s18, %s25
      %p27 = scmp.eq.s32.totalorder %s26, 0
      %s29 = sadd.s32 %s28, 1
      %s30 = scalar_select %p27, %s28, %s29
      %p33 = pneg %p27
      %p34 = scmp.eq.s32.totalorder %s18, 1
      %p35 = por %p33, %p34
      %p36 = scmp.ne.s32.totalorder %s28, %s31
      %p37 = scmp.eq.s32.totalorder %s18, 0
      %p38 = por %p36, %p37
      %p39 = scmp.ne.s32.totalorder %s28, %s31
      %p40 = scmp.eq.s32.totalorder %s23, 1
      %p41 = por %p39, %p40
      %p42 = scmp.ne.s32.totalorder %s31, %s32
      %p43 = scmp.eq.s32.totalorder %s23, 0
      %p44 = por %p42, %p43
      %p45 = scmp.ne.s32.totalorder %s31, %s32
      %p46 = scmp.eq.s32.totalorder %s24, 1
      %p47 = por %p45, %p46
      %p49 = scmp.ne.s32.totalorder %s32, %s48
      %p50 = scmp.eq.s32.totalorder %s24, 0
      %p51 = por %p49, %p50
      %s53 = sadd.s32 %s52, 1
      %p56 = scmp.eq.s32.totalorder %s18, 1
      %p57 = scmp.ne.s32.totalorder %s52, %s54
      %p58 = scmp.eq.s32.totalorder %s18, 0
      %p59 = por %p57, %p58
      %p60 = scmp.ne.s32.totalorder %s52, %s54
      %p61 = scmp.eq.s32.totalorder %s23, 1
      %p62 = por %p60, %p61
      %p63 = scmp.ne.s32.totalorder %s54, %s55
      %p64 = scmp.eq.s32.totalorder %s23, 0
      %p65 = por %p63, %p64
      %p66 = scmp.ne.s32.totalorder %s54, %s55
      %p67 = scmp.eq.s32.totalorder %s24, 1
      %p68 = por %p66, %p67
      %p70 = scmp.ne.s32.totalorder %s55, %s69
      %p71 = scmp.eq.s32.totalorder %s24, 0
      %p72 = por %p70, %p71
      %s74 = sadd.s32 %s73, 1
      %p77 = scmp.eq.s32.totalorder %s18, 1
      %p78 = scmp.ne.s32.totalorder %s73, %s75
      %p79 = scmp.eq.s32.totalorder %s18, 0
      %p80 = por %p78, %p79
      %p81 = scmp.ne.s32.totalorder %s73, %s75
      %p82 = scmp.eq.s32.totalorder %s23, 1
      %p83 = por %p81, %p82
      %p84 = scmp.ne.s32.totalorder %s75, %s76
      %p85 = scmp.eq.s32.totalorder %s23, 0
      %p86 = por %p84, %p85
      %p87 = scmp.ne.s32.totalorder %s75, %s76
      %p88 = scmp.eq.s32.totalorder %s24, 1
      %p89 = por %p87, %p88
      %p91 = scmp.ne.s32.totalorder %s76, %s90
      %p92 = scmp.eq.s32.totalorder %s24, 0
      %p93 = por %p91, %p92
      %s95 = sadd.s32 %s94, 1
      %p98 = scmp.eq.s32.totalorder %s18, 1
      %p99 = scmp.ne.s32.totalorder %s94, %s96
      %p100 = scmp.eq.s32.totalorder %s18, 0
      %p101 = por %p99, %p100
      %p102 = scmp.ne.s32.totalorder %s94, %s96
      %p103 = scmp.eq.s32.totalorder %s23, 1
      %p104 = por %p102, %p103
      %p105 = scmp.ne.s32.totalorder %s96, %s97
      %p106 = scmp.eq.s32.totalorder %s23, 0
      %p107 = por %p105, %p106
      %p108 = scmp.ne.s32.totalorder %s96, %s97
      %p109 = scmp.eq.s32.totalorder %s24, 1
      %p110 = por %p108, %p109
      %p112 = scmp.ne.s32.totalorder %s97, %s111
      %p113 = scmp.eq.s32.totalorder %s24, 0
      %p114 = por %p112, %p113
      %s116 = sadd.s32 %s115, 1
      %p119 = scmp.eq.s32.totalorder %s18, 1
      %p120 = scmp.ne.s32.totalorder %s115, %s117
      %p121 = scmp.eq.s32.totalorder %s18, 0
      %p122 = por %p120, %p121
      %p123 = scmp.ne.s32.totalorder %s115, %s117
      %p124 = scmp.eq.s32.totalorder %s23, 1
      %p125 = por %p123, %p124
      %p126 = scmp.ne.s32.totalorder %s117, %s118
      %p127 = scmp.eq.s32.totalorder %s23, 0
      %p128 = por %p126, %p127
      %p129 = scmp.ne.s32.totalorder %s117, %s118
      %p130 = scmp.eq.s32.totalorder %s24, 1
      %p131 = por %p129, %p130
      %p133 = scmp.ne.s32.totalorder %s118, %s132
      %p134 = scmp.eq.s32.totalorder %s24, 0
      %p135 = por %p133, %p134
      %s137 = sadd.s32 %s136, 1
      %p140 = scmp.eq.s32.totalorder %s18, 1
      %p141 = scmp.ne.s32.totalorder %s136, %s138
      %p142 = scmp.eq.s32.totalorder %s18, 0
      %p143 = por %p141, %p142
      %p144 = scmp.ne.s32.totalorder %s136, %s138
      %p145 = scmp.eq.s32.totalorder %s23, 1
      %p146 = por %p144, %p145
      %p147 = scmp.ne.s32.totalorder %s138, %s139
      %p148 = scmp.eq.s32.totalorder %s23, 0
      %p149 = por %p147, %p148
      %p150 = scmp.ne.s32.totalorder %s138, %s139
      %p151 = scmp.eq.s32.totalorder %s24, 1
      %p152 = por %p150, %p151
      %p154 = scmp.ne.s32.totalorder %s139, %s153
      %p155 = scmp.eq.s32.totalorder %s24, 0
      %p156 = por %p154, %p155
      %s157 = ssub.s32 %s18, %s25
      %p158 = scmp.eq.s32.totalorder %s157, 0
      %s160 = sadd.s32 %s159, 1
      %s161 = scalar_select %p158, %s159, %s160
      %p164 = pneg %p158
      %p165 = scmp.eq.s32.totalorder %s18, 1
      %p166 = por %p164, %p165
      %p167 = scmp.ne.s32.totalorder %s159, %s162
      %p168 = scmp.eq.s32.totalorder %s18, 0
      %p169 = por %p167, %p168
      %p170 = scmp.ne.s32.totalorder %s159, %s162
      %p171 = scmp.eq.s32.totalorder %s23, 1
      %p172 = por %p170, %p171
      %p173 = scmp.ne.s32.totalorder %s162, %s163
      %p174 = scmp.eq.s32.totalorder %s23, 0
      %p175 = por %p173, %p174
      %p176 = scmp.ne.s32.totalorder %s162, %s163
      %p177 = scmp.eq.s32.totalorder %s24, 1
      %p178 = por %p176, %p177
      %p180 = scmp.ne.s32.totalorder %s163, %s179
      %p181 = scmp.eq.s32.totalorder %s24, 0
      %p182 = por %p180, %p181
      %p183 = scmp.le.s32.totalorder 1, %s18
      %p184 = scmp.lt.s32.totalorder %s18, 3
      %p185 = pnand %p183, %p184
      %p186 = pneg %p185
      // Predicated region
      $region9: #{tpu_custom_call.1} parent=5 // pred_check
        _
      $region10: #{tpu_custom_call.1} parent=5 // pred_check_branch
        %188 = sbr.rel (%p185) target = $region12
      $region11: #{tpu_custom_call.1} parent=5 // pred_region
        %s189 = ssub.s32 %s18, 1
        // Predicated region
        $region13: #{tpu_custom_call.1} parent=11 // pred_check
          %p190 = pneg %p65
        $region14: #{tpu_custom_call.1} parent=11 // pred_check_branch
          %192 = sbr.rel (%p190) target = $region16
        $region15: #{tpu_custom_call.1} parent=11 // pred_region
          _
        $region16: #{tpu_custom_call.1} parent=11 // pred_fallthru
          _
        // Predicated region
        $region17: #{tpu_custom_call.1} parent=11 // pred_check
          %p193 = pneg %p86
        $region18: #{tpu_custom_call.1} parent=11 // pred_check_branch
          %195 = sbr.rel (%p193) target = $region20
        $region19: #{tpu_custom_call.1} parent=11 // pred_region
          _
        $region20: #{tpu_custom_call.1} parent=11 // pred_fallthru
          _
        // Predicated region
        $region21: #{tpu_custom_call.1} parent=11 // pred_check
          %p196 = pneg %p107
        $region22: #{tpu_custom_call.1} parent=11 // pred_check_branch
          %198 = sbr.rel (%p196) target = $region24
        $region23: #{tpu_custom_call.1} parent=11 // pred_region
          _
        $region24: #{tpu_custom_call.1} parent=11 // pred_fallthru
          _
        // Predicated region
        $region25: #{tpu_custom_call.1} parent=11 // pred_check
          %p199 = pneg %p128
        $region26: #{tpu_custom_call.1} parent=11 // pred_check_branch
          %201 = sbr.rel (%p199) target = $region28
        $region27: #{tpu_custom_call.1} parent=11 // pred_region
          _
        $region28: #{tpu_custom_call.1} parent=11 // pred_fallthru
          _
        // Predicated region
        $region29: #{tpu_custom_call.1} parent=11 // pred_check
          %p202 = pneg %p149
        $region30: #{tpu_custom_call.1} parent=11 // pred_check_branch
          %204 = sbr.rel (%p202) target = $region32
        $region31: #{tpu_custom_call.1} parent=11 // pred_region
          _
        $region32: #{tpu_custom_call.1} parent=11 // pred_fallthru
          _
      $region12: #{tpu_custom_call.1} parent=5 // pred_fallthru
        _
      %p205 = scmp.lt.s32.totalorder %s18, 2
      // Predicated region
      $region33: #{tpu_custom_call.1} parent=5 // pred_check
        %p206 = pneg %p205
      $region34: #{tpu_custom_call.1} parent=5 // pred_check_branch
        %208 = sbr.rel (%p206) target = $region36
      $region35: #{tpu_custom_call.1} parent=5 // pred_region
        // Predicated region
        $region37: #{tpu_custom_call.1} parent=35 // pred_check
          %p209 = pneg %p38
        $region38: #{tpu_custom_call.1} parent=35 // pred_check_branch
          %211 = sbr.rel (%p209) target = $region40
        $region39: #{tpu_custom_call.1} parent=35 // pred_region
          %s212 = sand.u32 %s28, 1
          %s213 = scalar_lea.sflag [#allocation3], %s212
          %s214 = sand.u32 %s28, 1
          %s215 = smul.addr %s214, 64
          %s216 = scalar_lea.vmem [#allocation2], %s215
          %s218 = ssub.s32 1024, 1024
          %219 = vsyncadd %s213, %s218
          %s220 = smul.addr %s18, 8
          %s221 = smul.addr %s220, 128
          %s222 = scalar_lea.hbm %s0, %s221
          %s223 = sshll.u32 %s216, 4
          %s224 = int_to_ptr.vmem [resolvable:$true] %s223
          %229 = dma.hbm_to_vmem [thread:$0]  %s222, 1024, %s224, %s213, 256, 256, 16
        $region40: #{tpu_custom_call.1} parent=35 // pred_fallthru
          _
      $region36: #{tpu_custom_call.1} parent=5 // pred_fallthru
        _
      %p230 = scmp.le.s32.totalorder 1, %s18
      %p231 = scmp.lt.s32.totalorder %s18, 3
      %p232 = pnand %p230, %p231
      %p233 = pneg %p232
      // Predicated region
      $region41: #{tpu_custom_call.1} parent=5 // pred_check
        _
      $region42: #{tpu_custom_call.1} parent=5 // pred_check_branch
        %235 = sbr.rel (%p232) target = $region44
      $region43: #{tpu_custom_call.1} parent=5 // pred_region
        %s236 = ssub.s32 %s18, 1
        %s237 = sand.u32 %s31, 1
        %s238 = scalar_lea.sflag [#allocation3], %s237
        %s239 = sand.u32 %s31, 1
        %s240 = smul.addr %s239, 64
        %s241 = scalar_lea.vmem [#allocation2], %s240
        // Predicated region
        $region45: #{tpu_custom_call.1} parent=43 // pred_check
          %p242 = pneg %p44
        $region46: #{tpu_custom_call.1} parent=43 // pred_check_branch
          %244 = sbr.rel (%p242) target = $region48
        $region47: #{tpu_custom_call.1} parent=43 // pred_region
          %245 = dma.done %s238, 1024
        $region48: #{tpu_custom_call.1} parent=43 // pred_fallthru
          _
        %s246 = sand.u32 %s31, 1
        %s247 = scalar_lea.sflag [#allocation3], %s246
        %s248 = sand.u32 %s31, 1
        %s249 = smul.addr %s248, 64
        %s250 = scalar_lea.vmem [#allocation2], %s249
        %p251 = pneg %p44
        %p252 = pneg %p41
        %p253 = pneg %p65
        %p254 = pneg %p62
        %p255 = pneg %p86
        %p256 = pneg %p83
        %p257 = pneg %p107
        %p258 = pneg %p104
        %p259 = pneg %p128
        %p260 = pneg %p125
        %p261 = pneg %p149
        %p262 = pneg %p146
        %p263 = pneg %p175
        %p264 = pneg %p172
        %s265 = sand.u32 %s162, 1
        %s266 = scalar_lea.sflag [#allocation4], %s265
        %s267 = sand.u32 %s162, 1
        %s268 = smul.addr %s267, 64
        %s269 = scalar_lea.vmem [#allocation5], %s268
        %v270 = vld [vmem:[%s241] sm:$0xff]
        %v271 = vld [vmem:[%s241 + $0x8] sm:$0xff]
        %v272 = vld [vmem:[%s241 + $0x10] sm:$0xff]
        %v273 = vld [vmem:[%s241 + $0x18] sm:$0xff]
        %v274 = vld [vmem:[%s241 + $0x20] sm:$0xff]
        %v275 = vld [vmem:[%s241 + $0x28] sm:$0xff]
        %v276 = vld [vmem:[%s241 + $0x30] sm:$0xff]
        %v277 = vld [vmem:[%s241 + $0x38] sm:$0xff]
        %v278 = vadd.f32 %v270, %v271
        %279 = vadd.xlane.f32.xlu0 %v278
        %v280 = vpop.xlane.xlu0 %279
        %v281 = vadd.f32 %v272, %v273
        %282 = vadd.xlane.f32.xlu0 %v281
        %v283 = vpop.xlane.xlu0 %282
        %v284 = vadd.f32 %v274, %v275
        %285 = vadd.xlane.f32.xlu0 %v284
        %v286 = vpop.xlane.xlu0 %285
        %v287 = vadd.f32 %v276, %v277
        %288 = vadd.xlane.f32.xlu0 %v287
        %v289 = vpop.xlane.xlu0 %288
        %v290 = vmul.f32 %v280, 0.00390625
        %v291 = vmul.f32 %v283, 0.00390625
        %v292 = vmul.f32 %v286, 0.00390625
        %v293 = vmul.f32 %v289, 0.00390625
        %v294 = vld [vmem:[%s1] sm:$0xff]
        %v295 = vld [vmem:[%s1 + $0x8] sm:$0xff]
        %v296 = vld [vmem:[%s1 + $0x10] sm:$0xff]
        %v297 = vld [vmem:[%s1 + $0x18] sm:$0xff]
        %v298 = vmul.f32 %v294, %v290
        %v299 = vmul.f32 %v295, %v291
        %v300 = vmul.f32 %v296, %v292
        %v301 = vmul.f32 %v297, %v293
        %vm302 = vcmask 15360
        %v303 = vsel %vm302, %v298, 0.0
        %v304 = vsel %vm302, %v299, 0.0
        %v305 = vadd.f32 %v303, %v304
        %v306 = vsel %vm302, %v300, 0.0
        %v307 = vadd.f32 %v305, %v306
        %v308 = vsel %vm302, %v301, 0.0
        %v309 = vadd.f32 %v307, %v308
        %v310 = vrot.slane %v309, 4
        %v311 = vadd.f32 %v309, %v310
        %v312 = vrot.slane %v311, 2
        %v313 = vadd.f32 %v311, %v312
        %v314 = vrot.slane %v313, 1
        %v315 = vadd.f32 %v313, %v314
        %v316 = vld [vmem:[%s2] sm:$0x1]
        %v317 = vadd.f32 %v315, %v316
        %v318 = vmax.f32 %v317, 0.0
        %v319 = vld [vmem:[%s3] sm:$0xff]
        %v320 = vld [vmem:[%s3 + $0x8] sm:$0xff]
        %v321 = vld [vmem:[%s3 + $0x10] sm:$0xff]
        %v322 = vld [vmem:[%s3 + $0x18] sm:$0xff]
        %v323 = vlaneseq
        %v324 = vshrl.u32 %v323, 7
        %v325 = vsub.s32 0, %v324
        %v326 = vrot.slane %v318, %v325
        %v327 = vmul.f32 %v319, %v326
        %v328 = vmul.f32 %v320, %v326
        %v329 = vmul.f32 %v321, %v326
        %v330 = vmul.f32 %v322, %v326
        %v331 = vsel %vm302, %v327, 0.0
        %332 = vadd.xlane.f32.xlu0 %v331
        %v333 = vpop.xlane.xlu0 %332
        %v334 = vsel %vm302, %v328, 0.0
        %335 = vadd.xlane.f32.xlu0 %v334
        %v336 = vpop.xlane.xlu0 %335
        %v337 = vsel %vm302, %v329, 0.0
        %338 = vadd.xlane.f32.xlu0 %v337
        %v339 = vpop.xlane.xlu0 %338
        %v340 = vsel %vm302, %v330, 0.0
        %341 = vadd.xlane.f32.xlu0 %v340
        %v342 = vpop.xlane.xlu0 %341
        %v343 = vld [vmem:[%s4] sm:$0xff]
        %v344 = vld [vmem:[%s4 + $0x8] sm:$0xff]
        %v345 = vld [vmem:[%s4 + $0x10] sm:$0xff]
        %v346 = vld [vmem:[%s4 + $0x18] sm:$0xff]
        %v347 = vadd.f32 %v333, %v343
        %v348 = vadd.f32 %v336, %v344
        %v349 = vadd.f32 %v339, %v345
        %v350 = vadd.f32 %v342, %v346
        %v351 = vxor.u32 %v347, 2147483648
        %v352 = vxor.u32 %v348, 2147483648
        %v353 = vxor.u32 %v349, 2147483648
        %v354 = vxor.u32 %v350, 2147483648
        %v355 = vmul.f32 %v351, 1.442695
        %v356 = vpow.pop %v355
        %v357 = vmul.f32 %v352, 1.442695
        %v358 = vpow.pop %v357
        %v359 = vmul.f32 %v353, 1.442695
        %v360 = vpow.pop %v359
        %v361 = vmul.f32 %v354, 1.442695
        %v362 = vpow.pop %v361
        %v363 = vadd.f32 %v356, 1.0
        %v364 = vadd.f32 %v358, 1.0
        %v365 = vadd.f32 %v360, 1.0
        %v366 = vadd.f32 %v362, 1.0
        %v367 = vrcp.pop %v363
        %v368 = vmul.f32 1.0, %v367
        %v369 = vrcp.pop %v364
        %v370 = vmul.f32 1.0, %v369
        %v371 = vrcp.pop %v365
        %v372 = vmul.f32 1.0, %v371
        %v373 = vrcp.pop %v366
        %v374 = vmul.f32 1.0, %v373
        %v375 = vmul.f32 %v368, 1.442695
        %v376 = vpow.pop %v375
        %v377 = vmul.f32 %v370, 1.442695
        %v378 = vpow.pop %v377
        %v379 = vmul.f32 %v372, 1.442695
        %v380 = vpow.pop %v379
        %v381 = vmul.f32 %v374, 1.442695
        %v382 = vpow.pop %v381
        %v383 = vld [vmem:[%s5] sm:$0x1]
        %vm384 = vcmask 261120
        %v386 = vsel %vm384, %v383, 0
        %388 = vmatprep.subr.mxu0 %v271
        %389 = vmatpush1.msra.mxu0 %v270
        %390 = vmatprep.subr.mxu0 %v273
        %391 = vmatpush1.msra.mxu0 %v272
        %392 = vmatprep.subr.mxu0 %v275
        %393 = vmatpush1.msra.mxu0 %v274
        %394 = vmatprep.subr.mxu0 %v277
        %395 = vmatpush1.msra.mxu0 %v276
        %396 = vmatprep.subr.mxu0 0.0
        %397 = vmatpush1.msra.mxu0 0.0
        %398 = vmatprep.subr.mxu0 0.0
        %399 = vmatpush1.msra.mxu0 0.0
        %400 = vmatprep.subr.mxu0 0.0
        %401 = vmatpush1.msra.mxu0 0.0
        %402 = vmatprep.subr.mxu0 0.0
        %403 = vmatpush1.msra.mxu0 0.0
        %404 = vmatprep.subr.mxu0 0.0
        %405 = vmatpush1.msra.mxu0 0.0
        %406 = vmatprep.subr.mxu0 0.0
        %407 = vmatpush1.msra.mxu0 0.0
        %408 = vmatprep.subr.mxu0 0.0
        %409 = vmatpush1.msra.mxu0 0.0
        %410 = vmatprep.subr.mxu0 0.0
        %411 = vmatpush1.msra.mxu0 0.0
        %412 = vmatprep.subr.mxu0 0.0
        %413 = vmatpush1.msra.mxu0 0.0
        %414 = vmatprep.subr.mxu0 0.0
        %415 = vmatpush1.msra.mxu0 0.0
        %416 = vmatprep.subr.mxu0 0.0
        %417 = vmatpush1.msra.mxu0 0.0
        %418 = vmatprep.subr.mxu0 0.0
        %419 = vmatpush1.msra.mxu0 0.0
        %420 = vmatprep.subr.mxu0 0.0
        %421 = vmatpush1.msra.mxu0 0.0
        %422 = vmatprep.subr.mxu0 0.0
        %423 = vmatpush1.msra.mxu0 0.0
        %424 = vmatprep.subr.mxu0 0.0
        %425 = vmatpush1.msra.mxu0 0.0
        %426 = vmatprep.subr.mxu0 0.0
        %427 = vmatpush1.msra.mxu0 0.0
        %428 = vmatprep.subr.mxu0 0.0
        %429 = vmatpush1.msra.mxu0 0.0
        %430 = vmatprep.subr.mxu0 0.0
        %431 = vmatpush1.msra.mxu0 0.0
        %432 = vmatprep.subr.mxu0 0.0
        %433 = vmatpush1.msra.mxu0 0.0
        %434 = vmatprep.subr.mxu0 0.0
        %435 = vmatpush1.msra.mxu0 0.0
        %436 = vmatprep.subr.mxu0 0.0
        %437 = vmatpush1.msra.mxu0 0.0
        %438 = vmatprep.subr.mxu0 0.0
        %439 = vmatpush1.msra.mxu0 0.0
        %440 = vmatprep.subr.mxu0 0.0
        %441 = vmatpush1.msra.mxu0 0.0
        %442 = vmatprep.subr.mxu0 0.0
        %443 = vmatpush1.msra.mxu0 0.0
        %444 = vmatprep.subr.mxu0 0.0
        %445 = vmatpush1.msra.mxu0 0.0
        %446 = vmatprep.subr.mxu0 0.0
        %447 = vmatpush1.msra.mxu0 0.0
        %448 = vmatprep.subr.mxu0 0.0
        %449 = vmatpush1.msra.mxu0 0.0
        %450 = vmatprep.subr.mxu0 0.0
        %451 = vmatpush1.msra.mxu0 0.0
        %452 = vmatprep.mubr.f32.mxu0 0.0
        %453 = vmatmul.mubr.f32.gmra.mrb[0].mxu0 %v386
        %v454 = vpop.f32.mrb[0].mxu0
        %v455 = vadd.f32 0.0, %v454
        %v456 = vpop.f32.mrb[0].mxu0
        %v457 = vadd.f32 0.0, %v456
        %458 = vdwg.mxu0
        %v459 = vxor.u32 %v455, 2147483648
        %v460 = vxor.u32 %v457, 2147483648
        %v461 = vmul.f32 %v459, 1.442695
        %v462 = vpow.pop %v461
        %v463 = vmul.f32 %v460, 1.442695
        %v464 = vpow.pop %v463
        %v465 = vadd.f32 %v462, 1.0
        %v466 = vadd.f32 %v464, 1.0
        %v467 = vrcp.pop %v465
        %v468 = vmul.f32 1.0, %v467
        %v469 = vrcp.pop %v466
        %v470 = vmul.f32 1.0, %v469
        %v471 = vmul.f32 %v468, 1.442695
        %v472 = vpow.pop %v471
        %v473 = vmul.f32 %v470, 1.442695
        %v474 = vpow.pop %v473
        %476 = vset.pattern.permute.xlu0 0
        %477 = vperm.xlu0 %476, %v376
        %v478 = vpop.permute.xlu0 %477
        %481 = vset.pattern.permute.xlu0 0
        %482 = vperm.xlu0 %481, %v378
        %v483 = vpop.permute.xlu0 %482
        %486 = vset.pattern.permute.xlu0 0
        %487 = vperm.xlu0 %486, %v380
        %v488 = vpop.permute.xlu0 %487
        %491 = vset.pattern.permute.xlu0 0
        %492 = vperm.xlu0 %491, %v382
        %v493 = vpop.permute.xlu0 %492
        %v495 = vmul.f32 %v270, %v478
        %v496 = vmul.f32 %v271, %v478
        %v497 = vmul.f32 %v272, %v483
        %v498 = vmul.f32 %v273, %v483
        %v499 = vmul.f32 %v274, %v488
        %v500 = vmul.f32 %v275, %v488
        %v501 = vmul.f32 %v276, %v493
        %v502 = vmul.f32 %v277, %v493
        %v503 = vlaneseq
        %v504 = vshrl.u32 %v503, 7
        %v505 = vsub.s32 0, %v504
        %v506 = vrot.slane %v472, %v505
        %v507 = vlaneseq
        %v508 = vshrl.u32 %v507, 7
        %v509 = vsub.s32 0, %v508
        %v510 = vrot.slane %v474, %v509
        %v511 = vmul.f32 %v495, %v506
        %v512 = vmul.f32 %v496, %v510
        %v513 = vmul.f32 %v497, %v506
        %v514 = vmul.f32 %v498, %v510
        %v515 = vmul.f32 %v499, %v506
        %v516 = vmul.f32 %v500, %v510
        %v517 = vmul.f32 %v501, %v506
        %v518 = vmul.f32 %v502, %v510
        %519 = vst [vmem:[%s269] sm:$0xff] %v511
        %520 = vst [vmem:[%s269 + $0x8] sm:$0xff] %v512
        %521 = vst [vmem:[%s269 + $0x10] sm:$0xff] %v513
        %522 = vst [vmem:[%s269 + $0x18] sm:$0xff] %v514
        %523 = vst [vmem:[%s269 + $0x20] sm:$0xff] %v515
        %524 = vst [vmem:[%s269 + $0x28] sm:$0xff] %v516
        %525 = vst [vmem:[%s269 + $0x30] sm:$0xff] %v517
        %526 = vst [vmem:[%s269 + $0x38] sm:$0xff] %v518
        %s527 = sand.u32 %s162, 1
        %s528 = scalar_lea.sflag [#allocation4], %s527
        %s529 = sand.u32 %s162, 1
        %s530 = smul.addr %s529, 64
        %s531 = scalar_lea.vmem [#allocation5], %s530
        // Predicated region
        $region49: #{tpu_custom_call.1} parent=43 // pred_check
          %p532 = pneg %p172
        $region50: #{tpu_custom_call.1} parent=43 // pred_check_branch
          %534 = sbr.rel (%p532) target = $region52
        $region51: #{tpu_custom_call.1} parent=43 // pred_region
          %s536 = ssub.s32 1024, 1024
          %537 = vsyncadd %s528, %s536
          %s538 = smul.addr %s23, 8
          %s539 = smul.addr %s538, 128
          %s540 = scalar_lea.hbm %s6, %s539
          %s541 = sshll.u32 %s531, 4
          %s542 = int_to_ptr.vmem [resolvable:$true] %s541
          %547 = dma.vmem_to_hbm [thread:$0]  %s542, 1024, %s540, %s528, 256, 256, 16
        $region52: #{tpu_custom_call.1} parent=43 // pred_fallthru
          _
      $region44: #{tpu_custom_call.1} parent=5 // pred_fallthru
        _
      %p548 = scmp.le.s32.totalorder 2, %s18
      // Predicated region
      $region53: #{tpu_custom_call.1} parent=5 // pred_check
        %p549 = pneg %p548
      $region54: #{tpu_custom_call.1} parent=5 // pred_check_branch
        %551 = sbr.rel (%p549) target = $region56
      $region55: #{tpu_custom_call.1} parent=5 // pred_region
        %s552 = ssub.s32 %s18, 2
        // Predicated region
        $region57: #{tpu_custom_call.1} parent=55 // pred_check
          %p553 = pneg %p178
        $region58: #{tpu_custom_call.1} parent=55 // pred_check_branch
          %555 = sbr.rel (%p553) target = $region60
        $region59: #{tpu_custom_call.1} parent=55 // pred_region
          %s556 = sand.u32 %s163, 1
          %s557 = scalar_lea.sflag [#allocation4], %s556
          %s558 = sand.u32 %s163, 1
          %s559 = smul.addr %s558, 64
          %s560 = scalar_lea.vmem [#allocation5], %s559
          %561 = dma.done %s557, 1024
        $region60: #{tpu_custom_call.1} parent=55 // pred_fallthru
          _
      $region56: #{tpu_custom_call.1} parent=5 // pred_fallthru
        _
    $region6: #{tpu_custom_call.1} parent=1 // loop_footer
      %s22 = sadd.s32 1, %s18
    $region7: #{tpu_custom_call.1} parent=1 // loop_footer_branch
      %17 = sbr.rel target = $region3
    $region8: #{tpu_custom_call.1} parent=1 // loop_exit
      _
    %562 = vsyncpa [#allocation3], 1
    %s563 = scalar_lea.sflag [#allocation3], 1
    %564 = vsyncpa %s563, 1
    %565 = vsyncpa [#allocation4], 1
    %s566 = scalar_lea.sflag [#allocation4], 1
    %567 = vsyncpa %s566, 1

</llo_original>
